<compile_context>
chip_gen: v7x
topology: tpu7x:2x2x1
jax: 0.10.0
libtpu: 0.0.40
codegen_flags: <defaults>
</compile_context>

<pallas_src>
import functools

import jax
import jax.numpy as jnp
from jax.experimental import pallas as pl
from jax.experimental.pallas import tpu as pltpu

_TILE_QUANTUM = 1024          # tile_b is rounded to this (keeps lane dim 128-divisible)
_MAX_TILE_B = 96 * 1024       # ~256 B/batch-elem double-buffered => <= 24 MiB of blocks


def _game2048_loss_kernel(vh_ref, vt_ref, ph_ref, pt_ref, out_ref, acc_ref, *,
                          batch, inv_b):
    """One batch tile (batch on the 128-wide lane axis).

    vh_ref : (1, TB)  value_hat
    vt_ref : (1, TB)  value_true
    ph_ref : (C, TB)  log-probabilities, classes on sublanes, batch on lanes
    pt_ref : (1, TB)  int32 target class per batch element
    out_ref: (1, 1)   f32 scalar in SMEM
    acc_ref: (2,)     f32 SMEM running [value_sum, nll_sum] (persists across steps)
    """
    step = pl.program_id(0)
    tb = vh_ref.shape[1]

    @pl.when(step == 0)
    def _():
        acc_ref[0] = jnp.float32(0.0)
        acc_ref[1] = jnp.float32(0.0)

    # Tail mask: lanes past the real batch contribute exactly zero.  Applied
    # with jnp.where BEFORE log / multiply, so garbage (possibly NaN) in the
    # out-of-bounds part of the last block can never pollute the sums.
    rem = batch - step * tb                            # >= tb for all but last tile
    lane = jax.lax.broadcasted_iota(jnp.int32, (1, tb), 1)
    valid = lane < rem                                 # (1, TB) bool

    # ---- ValueLoss partial: sum((value_hat - log(value_true))**2) ----
    vh = jnp.where(valid, vh_ref[...].astype(jnp.float32), 0.0)
    vt = jnp.where(valid, vt_ref[...].astype(jnp.float32), 1.0)   # log(1) = 0
    value_sum = jnp.sum((vh - jnp.log(vt)) ** 2)

    # ---- PolicyLoss partial: sum(-log_prob[target]) via sublane one-hot ----
    ph = ph_ref[...].astype(jnp.float32)               # (C, TB)
    pt = pt_ref[...]                                   # (1, TB) int32
    cls = jax.lax.broadcasted_iota(jnp.int32, ph.shape, 0)   # class id per sublane
    take = jnp.logical_and(cls == pt, valid)           # (C, TB)
    nll_sum = -jnp.sum(jnp.where(take, ph, 0.0))

    acc_ref[0] = acc_ref[0] + value_sum
    acc_ref[1] = acc_ref[1] + nll_sum

    @pl.when(step == pl.num_programs(0) - 1)
    def _():
        out_ref[0, 0] = (acc_ref[0] + acc_ref[1]) * inv_b


def game2048_loss(value_hat, value_true, policy_hat, policy_true, *,
                  tile_b=64 * 1024, policy_hat_cb=None):
    """Fused Game2048Loss forward.

    value_hat, value_true : (B,) float
    policy_hat            : (B, C) log-probabilities (NLLLoss input)
    policy_true           : (B,)   int class indices
    policy_hat_cb         : optional (C, B) log-probabilities.  If the producer
                            can emit this layout directly, pass it here and the
                            wrapper-side transpose (an extra HBM relayout pass
                            over the largest operand) is skipped entirely.
    """
    B = int(value_hat.shape[0])

    if policy_hat_cb is not None:
        ph = policy_hat_cb                     # already lane-dense (C, B)
        C = int(ph.shape[0])
    else:
        # TODO(synk): best handled upstream — have the producer emit (C, B)
        # log-probs (or raw (C, B) logits with log_softmax fused in-kernel);
        # this transpose is one extra XLA relayout pass over the policy tensor.
        C = int(policy_hat.shape[1])
        ph = policy_hat.T                      # (C, B) lane-dense

    vh = value_hat.reshape(1, B)
    vt = value_true.reshape(1, B)
    pt = policy_true.reshape(1, B).astype(jnp.int32)

    # Tile selection: large lane-dense tiles so the ~0.35 us/step grid overhead
    # is amortized; the double-buffered block footprint (~256*tb bytes) stays
    # under ~24 MiB, which fits every generation once the scoped VMEM limit is
    # raised to 32 MiB below (v7x physical VMEM is 64 MiB — leave headroom).
    tb = max(_TILE_QUANTUM, (int(tile_b) // _TILE_QUANTUM) * _TILE_QUANTUM)
    tb = min(tb, _MAX_TILE_B)
    if B <= tb:
        tb = B                                 # single full-extent block
    grid = pl.cdiv(B, tb)                      # partial last tile masked in-kernel

    kernel = functools.partial(_game2048_loss_kernel, batch=B, inv_b=1.0 / B)

    # TODO(synk): on v7x (2 TensorCores) a leading "parallel" grid axis of size
    # 2 with per-core partial sums could give up to ~2x if one TC cannot
    # saturate HBM; left out here to keep a single code path for v5e/v6e.
    out = pl.pallas_call(
        kernel,
        out_shape=jax.ShapeDtypeStruct((1, 1), jnp.float32),
        grid=(grid,),
        in_specs=[
            pl.BlockSpec((1, tb), lambda i: (0, i)),
            pl.BlockSpec((1, tb), lambda i: (0, i)),
            pl.BlockSpec((C, tb), lambda i: (0, i)),
            pl.BlockSpec((1, tb), lambda i: (0, i)),
        ],
        out_specs=pl.BlockSpec(memory_space=pltpu.MemorySpace.SMEM),
        scratch_shapes=[pltpu.SMEM((2,), jnp.float32)],
        compiler_params=pltpu.CompilerParams(
            dimension_semantics=("arbitrary",),   # grid axis carries the accumulator
            vmem_limit_bytes=32 * 1024 * 1024,
        ),
    )(vh, vt, ph, pt)
    return out[0, 0]


def _reference(value_hat, value_true, policy_hat, policy_true):
    value_loss = jnp.mean((value_hat - jnp.log(value_true)) ** 2)
    nll = -jnp.mean(policy_hat[jnp.arange(policy_hat.shape[0]), policy_true])
    return value_loss + nll


if __name__ == "__main__":
    key = jax.random.PRNGKey(0)
    k1, k2, k3, k4 = jax.random.split(key, 4)

    B, C = 8, 4  # 2048 has 4 moves

    value_hat = jax.random.normal(k1, (B,), dtype=jnp.float32)
    # value_true must be positive (it gets log'ed), same as the PyTorch reference.
    value_true = jax.random.uniform(k2, (B,), dtype=jnp.float32,
                                    minval=0.5, maxval=4.0)
    logits = jax.random.normal(k3, (B, C), dtype=jnp.float32)
    policy_hat = jax.nn.log_softmax(logits, axis=-1)
    policy_true = jax.random.randint(k4, (B,), 0, C, dtype=jnp.int32)

    out = game2048_loss(value_hat, value_true, policy_hat, policy_true)
    out = jax.block_until_ready(out)
    ref = _reference(value_hat, value_true, policy_hat, policy_true)
    assert jnp.allclose(out, ref, atol=1e-5, rtol=1e-5), (out, ref)

    # Producer-side (C, B) layout path (skips the wrapper transpose).
    out_cb = jax.block_until_ready(
        game2048_loss(value_hat, value_true, None, policy_true,
                      policy_hat_cb=policy_hat.T))
    assert jnp.allclose(out_cb, ref, atol=1e-5, rtol=1e-5), (out_cb, ref)

    # Exercise the multi-step grid + in-kernel tail-masking path (B not a
    # multiple of the tile, several accumulation steps).
    B2 = 2500
    kk1, kk2, kk3, kk4 = jax.random.split(jax.random.PRNGKey(1), 4)
    vh2 = jax.random.normal(kk1, (B2,), dtype=jnp.float32)
    vt2 = jax.random.uniform(kk2, (B2,), dtype=jnp.float32, minval=0.5, maxval=4.0)
    ph2 = jax.nn.log_softmax(jax.random.normal(kk3, (B2, C), dtype=jnp.float32), axis=-1)
    pt2 = jax.random.randint(kk4, (B2,), 0, C, dtype=jnp.int32)
    out2 = jax.block_until_ready(
        game2048_loss(vh2, vt2, ph2, pt2, tile_b=1024))
    ref2 = _reference(vh2, vt2, ph2, pt2)
    assert jnp.allclose(out2, ref2, atol=1e-5, rtol=1e-5), (out2, ref2)

    print("KERNEL_OK")
</pallas_src>

<mosaic_0001>
module attributes {stable_mosaic.version = 11 : i64} {
  func.func @_game2048_loss_kernel(%arg0: i32, %arg1: memref<1x8xf32, #tpu.memory_space<vmem>>, %arg2: memref<1x8xf32, #tpu.memory_space<vmem>>, %arg3: memref<4x8xf32, #tpu.memory_space<vmem>>, %arg4: memref<1x8xi32, #tpu.memory_space<vmem>>, %arg5: memref<1x1xf32, #tpu.memory_space<smem>>, %arg6: memref<2xf32, #tpu.memory_space<smem>>) attributes {dimension_semantics = [#tpu.dimension_semantics<arbitrary>], iteration_bounds = array<i64: 1>, scalar_prefetch = 0 : i64, scratch_operands = 1 : i64, tpu.core_type = #tpu.core_type<tc>, window_params = [{transform_indices = @transform_0, window_bounds = array<i64: 1, 8>}, {transform_indices = @transform_1, window_bounds = array<i64: 1, 8>}, {transform_indices = @transform_2, window_bounds = array<i64: 4, 8>}, {transform_indices = @transform_3, window_bounds = array<i64: 1, 8>}, {transform_indices = @transform_4, window_bounds = array<i64: 1, 1>}]} {
    %c0_i32 = arith.constant 0 : i32
    %0 = arith.cmpi eq, %arg0, %c0_i32 : i32
    %1 = arith.extui %0 : i1 to i32
    %c0_i32_0 = arith.constant 0 : i32
    %2 = arith.cmpi ne, %1, %c0_i32_0 : i32
    scf.if %2 {
      %cst_19 = arith.constant 0.000000e+00 : f32
      %c0_20 = arith.constant 0 : index
      %44 = memref.load %arg6[%c0_20] : memref<2xf32, #tpu.memory_space<smem>>
      memref.store %cst_19, %arg6[%c0_20] : memref<2xf32, #tpu.memory_space<smem>>
      %cst_21 = arith.constant 0.000000e+00 : f32
      %c1_22 = arith.constant 1 : index
      %45 = memref.load %arg6[%c1_22] : memref<2xf32, #tpu.memory_space<smem>>
      memref.store %cst_21, %arg6[%c1_22] : memref<2xf32, #tpu.memory_space<smem>>
    } else {
    }
    %c8_i32 = arith.constant 8 : i32
    %3 = arith.muli %arg0, %c8_i32 : i32
    %c8_i32_1 = arith.constant 8 : i32
    %4 = arith.subi %c8_i32_1, %3 : i32
    %5 = tpu.iota {dimensions = array<i32: 1>} : vector<1x8xi32>
    %6 = vector.broadcast %4 : i32 to vector<1x8xi32>
    %7 = arith.cmpi slt, %5, %6 : vector<1x8xi32>
    %c0 = arith.constant 0 : index
    %c0_2 = arith.constant 0 : index
    %8 = vector.load %arg1[%c0, %c0_2] : memref<1x8xf32, #tpu.memory_space<vmem>>, vector<1x8xf32>
    %cst = arith.constant 0.000000e+00 : f32
    %9 = vector.broadcast %cst : f32 to vector<1x8xf32>
    %10 = arith.select %7, %8, %9 : vector<1x8xi1>, vector<1x8xf32>
    %c0_3 = arith.constant 0 : index
    %c0_4 = arith.constant 0 : index
    %11 = vector.load %arg2[%c0_3, %c0_4] : memref<1x8xf32, #tpu.memory_space<vmem>>, vector<1x8xf32>
    %cst_5 = arith.constant 1.000000e+00 : f32
    %12 = vector.broadcast %cst_5 : f32 to vector<1x8xf32>
    %13 = arith.select %7, %11, %12 : vector<1x8xi1>, vector<1x8xf32>
    %14 = math.log %13 : vector<1x8xf32>
    %15 = arith.subf %10, %14 : vector<1x8xf32>
    %16 = arith.mulf %15, %15 : vector<1x8xf32>
    %17 = vector.shape_cast %16 : vector<1x8xf32> to vector<1x1x8xf32>
    %cst_6 = arith.constant dense<0.000000e+00> : vector<1xf32>
    %18 = vector.multi_reduction <add>, %17, %cst_6 [1, 2] : vector<1x1x8xf32> to vector<1xf32>
    %19 = vector.shape_cast %18 : vector<1xf32> to vector<1x1x1xf32>
    %20 = vector.extract %19[0, 0, 0] : f32 from vector<1x1x1xf32>
    %c0_7 = arith.constant 0 : index
    %c0_8 = arith.constant 0 : index
    %21 = vector.load %arg3[%c0_7, %c0_8] : memref<4x8xf32, #tpu.memory_space<vmem>>, vector<4x8xf32>
    %c0_9 = arith.constant 0 : index
    %c0_10 = arith.constant 0 : index
    %22 = vector.load %arg4[%c0_9, %c0_10] : memref<1x8xi32, #tpu.memory_space<vmem>>, vector<1x8xi32>
    %23 = tpu.iota {dimensions = array<i32: 0>} : vector<4x8xi32>
    %24 = vector.broadcast %22 : vector<1x8xi32> to vector<4x8xi32>
    %25 = arith.cmpi eq, %23, %24 : vector<4x8xi32>
    %26 = vector.broadcast %7 : vector<1x8xi1> to vector<4x8xi1>
    %27 = arith.andi %25, %26 : vector<4x8xi1>
    %cst_11 = arith.constant 0.000000e+00 : f32
    %28 = vector.broadcast %cst_11 : f32 to vector<4x8xf32>
    %29 = arith.select %27, %21, %28 : vector<4x8xi1>, vector<4x8xf32>
    %30 = vector.shape_cast %29 : vector<4x8xf32> to vector<1x4x8xf32>
    %cst_12 = arith.constant dense<0.000000e+00> : vector<1xf32>
    %31 = vector.multi_reduction <add>, %30, %cst_12 [1, 2] : vector<1x4x8xf32> to vector<1xf32>
    %32 = vector.shape_cast %31 : vector<1xf32> to vector<1x1x1xf32>
    %33 = vector.extract %32[0, 0, 0] : f32 from vector<1x1x1xf32>
    %cst_13 = arith.constant 0.000000e+00 : f32
    %34 = arith.subf %cst_13, %33 : f32
    %c0_14 = arith.constant 0 : index
    %35 = memref.load %arg6[%c0_14] : memref<2xf32, #tpu.memory_space<smem>>
    %36 = arith.addf %35, %20 : f32
    %c0_15 = arith.constant 0 : index
    %37 = memref.load %arg6[%c0_15] : memref<2xf32, #tpu.memory_space<smem>>
    memref.store %36, %arg6[%c0_15] : memref<2xf32, #tpu.memory_space<smem>>
    %c1 = arith.constant 1 : index
    %38 = memref.load %arg6[%c1] : memref<2xf32, #tpu.memory_space<smem>>
    %39 = arith.addf %38, %34 : f32
    %c1_16 = arith.constant 1 : index
    %40 = memref.load %arg6[%c1_16] : memref<2xf32, #tpu.memory_space<smem>>
    memref.store %39, %arg6[%c1_16] : memref<2xf32, #tpu.memory_space<smem>>
    %c0_i32_17 = arith.constant 0 : i32
    %41 = arith.cmpi eq, %arg0, %c0_i32_17 : i32
    %42 = arith.extui %41 : i1 to i32
    %c0_i32_18 = arith.constant 0 : i32
    %43 = arith.cmpi ne, %42, %c0_i32_18 : i32
    scf.if %43 {
      %c0_19 = arith.constant 0 : index
      %44 = memref.load %arg6[%c0_19] : memref<2xf32, #tpu.memory_space<smem>>
      %c1_20 = arith.constant 1 : index
      %45 = memref.load %arg6[%c1_20] : memref<2xf32, #tpu.memory_space<smem>>
      %46 = arith.addf %44, %45 : f32
      %cst_21 = arith.constant 1.250000e-01 : f32
      %47 = arith.mulf %46, %cst_21 : f32
      %c0_22 = arith.constant 0 : index
      %c0_23 = arith.constant 0 : index
      %48 = memref.load %arg5[%c0_22, %c0_23] : memref<1x1xf32, #tpu.memory_space<smem>>
      memref.store %47, %arg5[%c0_22, %c0_23] : memref<1x1xf32, #tpu.memory_space<smem>>
    } else {
    }
    return
  }
  func.func @transform_0(%arg0: i32) -> (i32, i32) {
    %c0_i32 = arith.constant 0 : i32
    %c0_i32_0 = arith.constant 0 : i32
    return %c0_i32, %arg0 : i32, i32
  }
  func.func @transform_1(%arg0: i32) -> (i32, i32) {
    %c0_i32 = arith.constant 0 : i32
    %c0_i32_0 = arith.constant 0 : i32
    return %c0_i32, %arg0 : i32, i32
  }
  func.func @transform_2(%arg0: i32) -> (i32, i32) {
    %c0_i32 = arith.constant 0 : i32
    %c0_i32_0 = arith.constant 0 : i32
    return %c0_i32, %arg0 : i32, i32
  }
  func.func @transform_3(%arg0: i32) -> (i32, i32) {
    %c0_i32 = arith.constant 0 : i32
    %c0_i32_0 = arith.constant 0 : i32
    return %c0_i32, %arg0 : i32, i32
  }
  func.func @transform_4(%arg0: i32) -> (i32, i32) {
    %c0_i32 = arith.constant 0 : i32
    %c0_i32_0 = arith.constant 0 : i32
    %c0_i32_1 = arith.constant 0 : i32
    return %c0_i32, %c0_i32_0 : i32, i32
  }
}

</mosaic_0001>

<llo_original>
// kernel: tpu_custom_call.1
$region0: #{tpu_custom_call.1}
  #allocation0 [shape = 'u32[]', space=smem, size = 0x4, offset = 0x4, fixed_abs, tag = 'smem constant byte address 0x4 - core index']
  #allocation1 [shape = 'u32[144,128]{1,0:T(1,128)}', space=vmem, size = 0x12000, scoped, tag = 'internal scratch']
  #allocation2 [shape = 'f32[2]{0:T(128)}', space=smem, size = 0x200, scoped, tag = 'scratch operand']
  %s0 = inlined_call_operand.hbm [shape: f32[1,8], index: 0, kind: input, shape index: {}]
  %s1 = inlined_call_operand.vmem [shape: f32[1,8], index: 1, kind: input, shape index: {}]
  %s2 = inlined_call_operand.vmem [shape: f32[4,8], index: 2, kind: input, shape index: {}]
  %s3 = inlined_call_operand.vmem [shape: s32[1,8], index: 3, kind: input, shape index: {}]
  %s4 = inlined_call_operand.hbm [shape: f32[1,1], index: 4, kind: output, shape index: {}]
  %s5 = sld [smem:[#allocation0]]
  $region38: #{tpu_custom_call.1} parent=0
    _
  %s7 = ssub.s32 1, %s5
  %s8 = scalar_select 0, %s7, %s5
  $region1: #{tpu_custom_call.1} parent=0
    #allocation3 [shape = 'u8[512]{0}', space=vmem, size = 0x400, scoped, tag = 'input window, operand 0, single buffered']
    #allocation4 [shape = 's32[1]{0}', space=sflag, size = 0x4, scoped, tag = 'scoped memory for tpu_custom_call.1']
    #allocation5 [shape = 's32[1]{0}', space=sflag, size = 0x4, scoped, tag = 'scoped memory for tpu_custom_call.1']
    #allocation6 [shape = 'u8[512]{0}', space=smem, size = 0x200, scoped, tag = 'output window, operand 0, single buffered']
    %9 = vsyncpa [#allocation4], 0
    %10 = vsyncpa [#allocation5], 0
    // Predicated region
    $region2: #{tpu_custom_call.1} parent=1 // pred_check
      _
    $region3: #{tpu_custom_call.1} parent=1 // pred_check_branch
      %12 = sbr.rel (0) target = $region5
    $region4: #{tpu_custom_call.1} parent=1 // pred_region
      %s14 = ssub.s32 16, 16
      %15 = vsyncadd [#allocation4], %s14
      %s17 = sshll.u32 [#allocation3], 4
      %s18 = int_to_ptr.vmem [resolvable:$true] %s17
      %20 = dma.hbm_to_vmem [thread:$0]  %s0, 16, %s18, [#allocation4]
    $region5: #{tpu_custom_call.1} parent=1 // pred_fallthru
      _
    // Predicated region
    $region6: #{tpu_custom_call.1} parent=1 // pred_check
      _
    $region7: #{tpu_custom_call.1} parent=1 // pred_check_branch
      %22 = sbr.rel (0) target = $region9
    $region8: #{tpu_custom_call.1} parent=1 // pred_region
      _
    $region9: #{tpu_custom_call.1} parent=1 // pred_fallthru
      _
    // Predicated region
    $region10: #{tpu_custom_call.1} parent=1 // pred_check
      _
    $region11: #{tpu_custom_call.1} parent=1 // pred_check_branch
      %24 = sbr.rel (0) target = $region13
    $region12: #{tpu_custom_call.1} parent=1 // pred_region
      _
    $region13: #{tpu_custom_call.1} parent=1 // pred_fallthru
      _
    // Predicated region
    $region14: #{tpu_custom_call.1} parent=1 // pred_check
      _
    $region15: #{tpu_custom_call.1} parent=1 // pred_check_branch
      %26 = sbr.rel (0) target = $region17
    $region16: #{tpu_custom_call.1} parent=1 // pred_region
      _
    $region17: #{tpu_custom_call.1} parent=1 // pred_fallthru
      _
    // Predicated region
    $region18: #{tpu_custom_call.1} parent=1 // pred_check
      _
    $region19: #{tpu_custom_call.1} parent=1 // pred_check_branch
      %28 = sbr.rel (0) target = $region21
    $region20: #{tpu_custom_call.1} parent=1 // pred_region
      %29 = dma.done [#allocation4], 16
    $region21: #{tpu_custom_call.1} parent=1 // pred_fallthru
      _
    %p30 = scmp.eq.s32.totalorder 0, 0
    // Predicated region
    $region22: #{tpu_custom_call.1} parent=1 // pred_check
      %p31 = pneg %p30
    $region23: #{tpu_custom_call.1} parent=1 // pred_check_branch
      %33 = sbr.rel (%p31) target = $region25
    $region24: #{tpu_custom_call.1} parent=1 // pred_region
      %s34 = scalar_lea.smem [#allocation2], 0
      %35 = sst [smem:[%s34]] 0.0
      %s36 = scalar_lea.smem [#allocation2], 1
      %37 = sst [smem:[%s36]] 0.0
    $region25: #{tpu_custom_call.1} parent=1 // pred_fallthru
      _
    %s38 = smul.u32 0, 8
    %s39 = ssub.s32 8, %s38
    %v40 = vlaneseq
    %v41 = vand.u32 %v40, 127
    %v42 = vstv %s39
    %vm43 = vcmp.lt.s32.totalorder %v41, %v42
    %v44 = vld [vmem:[#allocation3] sm:$0x1]
    %v45 = vsel %vm43, %v44, 0.0
    %v46 = vld [vmem:[%s1] sm:$0x1]
    %v47 = vsel %vm43, %v46, 1.0
    %v48 = vlog2.pop %v47
    %v49 = vmul.f32 %v48, 0.6931472
    %v50 = vsub.f32 %v45, %v49
    %v51 = vmul.f32 %v50, %v50
    %vm52 = vcmask 57344
    %v53 = vsel %vm52, %v51, 0.0
    %54 = vadd.xlane.f32.xlu0 %v53
    %v55 = vpop.xlane.xlu0 %54
    %v56 = vrot.slane %v55, 4
    %v57 = vadd.f32 %v55, %v56
    %v58 = vrot.slane %v57, 2
    %v59 = vadd.f32 %v57, %v58
    %v60 = vrot.slane %v59, 1
    %v61 = vadd.f32 %v59, %v60
    %s62 = vtos %v61
    %v63 = vld [vmem:[%s2] sm:$0xf]
    %v64 = vld [vmem:[%s3] sm:$0x1]
    %v65 = vlaneseq
    %v66 = vshrl.u32 %v65, 7
    %v67 = vlaneseq
    %v68 = vshrl.u32 %v67, 7
    %v69 = vsub.s32 0, %v68
    %v70 = vrot.slane %v64, %v69
    %vm71 = vcmp.eq.s32.totalorder %v66, %v70
    %v72 = vsel %vm43, 1, 0
    %vm73 = vcmp.eq.s32.totalorder %v72, 1
    %vm74 = vmand %vm71, %vm73
    %v75 = vsel %vm74, %v63, 0.0
    %vm76 = vcmask 60416
    %v77 = vsel %vm76, %v75, 0.0
    %78 = vadd.xlane.f32.xlu0 %v77
    %v79 = vpop.xlane.xlu0 %78
    %v80 = vrot.slane %v79, 4
    %v81 = vadd.f32 %v79, %v80
    %v82 = vrot.slane %v81, 2
    %v83 = vadd.f32 %v81, %v82
    %v84 = vrot.slane %v83, 1
    %v85 = vadd.f32 %v83, %v84
    %s86 = vtos %v85
    %s87 = ssub.f32 0.0, %s86
    %s88 = sld [smem:[#allocation2]]
    %s89 = sadd.f32 %s88, %s62
    %s90 = scalar_lea.smem [#allocation2], 0
    %91 = sst [smem:[%s90]] %s89
    %s92 = sld [smem:[#allocation2 + $0x1]]
    %s93 = sadd.f32 %s92, %s87
    %s94 = scalar_lea.smem [#allocation2], 1
    %95 = sst [smem:[%s94]] %s93
    // Predicated region
    $region26: #{tpu_custom_call.1} parent=1 // pred_check
      %p96 = pneg %p30
    $region27: #{tpu_custom_call.1} parent=1 // pred_check_branch
      %98 = sbr.rel (%p96) target = $region29
    $region28: #{tpu_custom_call.1} parent=1 // pred_region
      %s99 = sld [smem:[#allocation2]]
      %s100 = sld [smem:[#allocation2 + $0x1]]
      %s101 = sadd.f32 %s99, %s100
      %s102 = smul.f32 %s101, 0.125
      %s103 = scalar_lea.smem [#allocation6], 0
      %104 = sst [smem:[%s103]] %s102
    $region29: #{tpu_custom_call.1} parent=1 // pred_fallthru
      _
    // Predicated region
    $region30: #{tpu_custom_call.1} parent=1 // pred_check
      _
    $region31: #{tpu_custom_call.1} parent=1 // pred_check_branch
      %106 = sbr.rel (0) target = $region33
    $region32: #{tpu_custom_call.1} parent=1 // pred_region
      %s108 = ssub.s32 16, 16
      %109 = vsyncadd [#allocation5], %s108
      %112 = dma.smem_to_hbm [#allocation6], 16, %s4, [#allocation5]
    $region33: #{tpu_custom_call.1} parent=1 // pred_fallthru
      _
    // Predicated region
    $region34: #{tpu_custom_call.1} parent=1 // pred_check
      _
    $region35: #{tpu_custom_call.1} parent=1 // pred_check_branch
      %114 = sbr.rel (0) target = $region37
    $region36: #{tpu_custom_call.1} parent=1 // pred_region
      %115 = dma.done [#allocation5], 16
    $region37: #{tpu_custom_call.1} parent=1 // pred_fallthru
      _
    %116 = sfence
    %117 = vsyncpa [#allocation4], 1
    %118 = vsyncpa [#allocation5], 1

</llo_original>
